<compile_context>
chip_gen: v6e
topology: v6e:2x2x1
jax: 0.10.0
libtpu: 0.0.40
codegen_flags: <defaults>
</compile_context>

<pallas_src>
import jax
import jax.numpy as jnp
from jax import lax
from jax.experimental import pallas as pl
from jax.experimental.pallas import tpu as pltpu


def _logreg_kernel(x_ref, w_ref, b_ref, o_ref):
    """One batch tile.

    x_ref: (TB, D) f32 VMEM   -- tile of input rows
    w_ref: (2, D)  f32 VMEM   -- full weight (lane-dense, resident)
    b_ref: (2,)    f32 SMEM   -- bias scalars
    o_ref: (2, TB) f32 VMEM   -- log_softmax output, transposed (lane-dense)
    """
    # logits^T = W @ X^T  -> (2, TB); contraction over the feature axis (MXU).
    zt = lax.dot_general(
        w_ref[...], x_ref[...],
        dimension_numbers=(((1,), (1,)), ((), ())),
        preferred_element_type=jnp.float32,
    )
    # Two-class log_softmax:  d = z1 - z0 (+ bias delta)
    #   out0 = -softplus(d),   out1 = -softplus(-d) = d - softplus(d)
    d = zt[1:2, :] - zt[0:1, :] + (b_ref[1] - b_ref[0])              # (1, TB)
    sp = jnp.maximum(d, 0.0) + jnp.log(1.0 + jnp.exp(-jnp.abs(d)))   # softplus(d)
    o_ref[0:1, :] = -sp
    o_ref[1:2, :] = d - sp


def logistic_regression(x, weight, bias, *, tb=None):
    """log_softmax(x @ weight.T + bias, axis=1).

    x: (B, D) f32.  weight: (2, D) f32 (PyTorch nn.Linear layout).  bias: (2,) f32.
    """
    B, D = x.shape
    assert weight.shape == (2, D) and bias.shape == (2,)

    # ---- batch-tile size --------------------------------------------------
    if tb is None:
        # ~12 MiB of double-buffered x tiles: safe vs the scoped-VMEM default
        # on every generation (v5e 16 MiB .. v7x 32/64 MiB); prefer the biggest
        # tile that fits (per-step overhead ~0.35 us, wider lane-dense stores).
        tb = (6 * 1024 * 1024) // (4 * D)
        tb = max(128, min(4096, (tb // 128) * 128))
    else:
        tb = max(128, (tb // 128) * 128)
    if B <= tb:
        tb = B                 # single block; block dims == full array dims

    grid = (pl.cdiv(B, tb),)   # ragged last block handled by Pallas masking

    vmem_bytes = (2 * tb * D * 4          # double-buffered x tiles
                  + 2 * 8 * D * 4         # (2, D) weight padded to 8 sublanes
                  + 2 * 8 * tb * 4        # double-buffered transposed output
                  + (2 << 20))            # slack
    vmem_limit = int(min(max(vmem_bytes, 16 << 20), 64 << 20))

    out_t = pl.pallas_call(
        _logreg_kernel,
        out_shape=jax.ShapeDtypeStruct((2, B), jnp.float32),
        grid=grid,
        in_specs=[
            pl.BlockSpec((tb, D), lambda i: (i, 0)),                # x tile
            pl.BlockSpec((2, D), lambda i: (0, 0)),                 # weight, resident
            pl.BlockSpec(memory_space=pltpu.MemorySpace.SMEM),      # bias scalars
        ],
        out_specs=pl.BlockSpec((2, tb), lambda i: (0, i)),          # lane-dense out^T
        compiler_params=pltpu.CompilerParams(
            dimension_semantics=("parallel",),
            vmem_limit_bytes=vmem_limit,
        ),
        cost_estimate=pl.CostEstimate(
            flops=4 * B * D,
            transcendentals=2 * B,
            bytes_accessed=4 * (B * D + 2 * D + 2 + 2 * B),
        ),
    )(x, weight, bias)

    return out_t.T             # back to (B, 2), PyTorch layout


if __name__ == "__main__":
    key = jax.random.PRNGKey(0)
    k_x, k_w, k_b, k_x2, k_x3 = jax.random.split(key, 5)

    # ---- small shape consistent with the module ---------------------------
    B, fc_dim = 8, 32
    bound = 1.0 / jnp.sqrt(jnp.float32(fc_dim))
    weight = jax.random.uniform(k_w, (2, fc_dim), jnp.float32, -bound, bound)
    bias = jax.random.uniform(k_b, (2,), jnp.float32, -bound, bound)
    x = jax.random.normal(k_x, (B, fc_dim), jnp.float32)

    out = jax.block_until_ready(logistic_regression(x, weight, bias))
    ref = jax.nn.log_softmax(x @ weight.T + bias, axis=1)
    assert out.shape == (B, 2)
    assert jnp.allclose(out, ref, atol=1e-5, rtol=1e-5), "mismatch vs reference (small)"

    # ---- exercise the tiled path (grid > 1, ragged last block, no padding) -
    B2, D2 = 272, 256
    w2 = jax.random.uniform(k_w, (2, D2), jnp.float32, -0.1, 0.1)
    b2 = jax.random.uniform(k_b, (2,), jnp.float32, -0.1, 0.1)
    x2 = jax.random.normal(k_x2, (B2, D2), jnp.float32)

    out2 = jax.block_until_ready(logistic_regression(x2, w2, b2, tb=128))
    ref2 = jax.nn.log_softmax(x2 @ w2.T + b2, axis=1)
    assert out2.shape == (B2, 2)
    assert jnp.allclose(out2, ref2, atol=1e-5, rtol=1e-5), "mismatch vs reference (tiled)"

    # ---- default tb heuristic with a larger, multiple-of-128 batch ---------
    B3, D3 = 1024, 384
    w3 = jax.random.uniform(k_w, (2, D3), jnp.float32, -0.1, 0.1)
    b3 = jax.random.uniform(k_b, (2,), jnp.float32, -0.1, 0.1)
    x3 = jax.random.normal(k_x3, (B3, D3), jnp.float32)

    out3 = jax.block_until_ready(logistic_regression(x3, w3, b3))
    ref3 = jax.nn.log_softmax(x3 @ w3.T + b3, axis=1)
    assert out3.shape == (B3, 2)
    assert jnp.allclose(out3, ref3, atol=1e-5, rtol=1e-5), "mismatch vs reference (large)"

    print("KERNEL_OK")
</pallas_src>

<mosaic_0001>
module attributes {stable_mosaic.version = 11 : i64} {
  func.func @_logreg_kernel(%arg0: i32, %arg1: memref<8x32xf32, #tpu.memory_space<vmem>>, %arg2: memref<2x32xf32, #tpu.memory_space<vmem>>, %arg3: memref<2xf32, #tpu.memory_space<smem>>, %arg4: memref<2x8xf32, #tpu.memory_space<vmem>>) attributes {dimension_semantics = [#tpu.dimension_semantics<parallel>], iteration_bounds = array<i64: 1>, scalar_prefetch = 0 : i64, scratch_operands = 0 : i64, tpu.core_type = #tpu.core_type<tc>, window_params = [{transform_indices = @transform_0, window_bounds = array<i64: 8, 32>}, {pipeline_mode = #tpu.pipeline_mode<synchronous>, transform_indices = @transform_1, window_bounds = array<i64: 2, 32>}, {transform_indices = @transform_2, window_bounds = array<i64: 2>}, {transform_indices = @transform_3, window_bounds = array<i64: 2, 8>}]} {
    %c0 = arith.constant 0 : index
    %c0_0 = arith.constant 0 : index
    %0 = vector.load %arg2[%c0, %c0_0] : memref<2x32xf32, #tpu.memory_space<vmem>>, vector<2x32xf32>
    %c0_1 = arith.constant 0 : index
    %c0_2 = arith.constant 0 : index
    %1 = vector.load %arg1[%c0_1, %c0_2] : memref<8x32xf32, #tpu.memory_space<vmem>>, vector<8x32xf32>
    %cst = arith.constant dense<0.000000e+00> : vector<2x8xf32>
    %2 = tpu.matmul %0, %1, %cst {dimension_numbers = #tpu.dot_dimension_numbers<[1], [1], [0], [0], [0, 0, 1, 0], [], []>} : vector<2x32xf32>, vector<8x32xf32>, vector<2x8xf32> -> vector<2x8xf32>
    %3 = vector.extract_strided_slice %2 {offsets = [1, 0], sizes = [1, 8], strides = [1, 1]} : vector<2x8xf32> to vector<1x8xf32>
    %4 = vector.extract_strided_slice %2 {offsets = [0, 0], sizes = [1, 8], strides = [1, 1]} : vector<2x8xf32> to vector<1x8xf32>
    %5 = arith.subf %3, %4 : vector<1x8xf32>
    %c1 = arith.constant 1 : index
    %6 = memref.load %arg3[%c1] : memref<2xf32, #tpu.memory_space<smem>>
    %c0_3 = arith.constant 0 : index
    %7 = memref.load %arg3[%c0_3] : memref<2xf32, #tpu.memory_space<smem>>
    %8 = arith.subf %6, %7 : f32
    %9 = vector.broadcast %8 : f32 to vector<1x8xf32>
    %10 = arith.addf %5, %9 : vector<1x8xf32>
    %cst_4 = arith.constant 0.000000e+00 : f32
    %11 = vector.broadcast %cst_4 : f32 to vector<1x8xf32>
    %12 = arith.maximumf %10, %11 : vector<1x8xf32>
    %13 = math.absf %10 : vector<1x8xf32>
    %cst_5 = arith.constant 0.000000e+00 : f32
    %14 = vector.broadcast %cst_5 : f32 to vector<1x8xf32>
    %15 = arith.subf %14, %13 : vector<1x8xf32>
    %16 = math.exp %15 : vector<1x8xf32>
    %cst_6 = arith.constant 1.000000e+00 : f32
    %17 = vector.broadcast %cst_6 : f32 to vector<1x8xf32>
    %18 = arith.addf %17, %16 : vector<1x8xf32>
    %19 = math.log %18 : vector<1x8xf32>
    %20 = arith.addf %12, %19 : vector<1x8xf32>
    %cst_7 = arith.constant 0.000000e+00 : f32
    %21 = vector.broadcast %cst_7 : f32 to vector<1x8xf32>
    %22 = arith.subf %21, %20 : vector<1x8xf32>
    %c0_8 = arith.constant 0 : index
    %c0_9 = arith.constant 0 : index
    %23 = vector.load %arg4[%c0_8, %c0_9] : memref<2x8xf32, #tpu.memory_space<vmem>>, vector<1x8xf32>
    tpu.vector_store %arg4[%c0_8, %c0_9], %22 {strides = array<i32>} : memref<2x8xf32, #tpu.memory_space<vmem>>, vector<1x8xf32>,
    %24 = arith.subf %10, %20 : vector<1x8xf32>
    %c1_10 = arith.constant 1 : index
    %c0_11 = arith.constant 0 : index
    %25 = vector.load %arg4[%c1_10, %c0_11] : memref<2x8xf32, #tpu.memory_space<vmem>>, vector<1x8xf32>
    tpu.vector_store %arg4[%c1_10, %c0_11], %24 {strides = array<i32>} : memref<2x8xf32, #tpu.memory_space<vmem>>, vector<1x8xf32>,
    return
  }
  func.func @transform_0(%arg0: i32) -> (i32, i32) {
    %c0_i32 = arith.constant 0 : i32
    %c0_i32_0 = arith.constant 0 : i32
    return %arg0, %c0_i32 : i32, i32
  }
  func.func @transform_1(%arg0: i32) -> (i32, i32) {
    %c0_i32 = arith.constant 0 : i32
    %c0_i32_0 = arith.constant 0 : i32
    %c0_i32_1 = arith.constant 0 : i32
    return %c0_i32, %c0_i32_0 : i32, i32
  }
  func.func @transform_2(%arg0: i32) -> i32 {
    %c0_i32 = arith.constant 0 : i32
    %c0_i32_0 = arith.constant 0 : i32
    return %c0_i32 : i32
  }
  func.func @transform_3(%arg0: i32) -> (i32, i32) {
    %c0_i32 = arith.constant 0 : i32
    %c0_i32_0 = arith.constant 0 : i32
    return %c0_i32, %arg0 : i32, i32
  }
}

</mosaic_0001>

<llo_original>
// kernel: tpu_custom_call.1
$region0: #{tpu_custom_call.1}
  #allocation0 [shape = 'u32[]', space=smem, size = 0x4, offset = 0x4, fixed_abs, tag = 'smem constant byte address 0x4 - core index']
  #allocation1 [shape = 'u32[144,128]{1,0:T(1,128)}', space=vmem, size = 0x12000, scoped, tag = 'internal scratch']
  %s0 = inlined_call_operand.hbm [shape: f32[8,32], index: 0, kind: input, shape index: {}]
  %s1 = inlined_call_operand.hbm [shape: f32[2,32], index: 1, kind: input, shape index: {}]
  %s2 = inlined_call_operand.vmem [shape: f32[2], index: 2, kind: input, shape index: {}]
  %s3 = inlined_call_operand.hbm [shape: f32[2,8], index: 3, kind: output, shape index: {}]
  %s4 = sld [smem:[#allocation0]]
  $region34: #{tpu_custom_call.1} parent=0
    _
  %s6 = ssub.s32 1, %s4
  %s7 = scalar_select 0, %s6, %s4
  $region1: #{tpu_custom_call.1} parent=0
    #allocation2 [shape = 'u8[4096]{0}', space=vmem, size = 0x1000, scoped, tag = 'input window, operand 0, single buffered']
    #allocation3 [shape = 's32[1]{0}', space=sflag, size = 0x4, scoped, tag = 'scoped memory for tpu_custom_call.1']
    #allocation4 [shape = 's32[1]{0}', space=sflag, size = 0x4, scoped, tag = 'scoped memory for tpu_custom_call.1']
    #allocation5 [shape = 's32[1]{0}', space=sflag, size = 0x4, scoped, tag = 'scoped memory for tpu_custom_call.1']
    #allocation6 [shape = 'u8[1024]{0}', space=vmem, size = 0x400, scoped, tag = 'input window, operand 1, single buffered']
    #allocation7 [shape = 's32[1]{0}', space=sflag, size = 0x4, scoped, tag = 'scoped memory for tpu_custom_call.1']
    #allocation8 [shape = 'u8[512]{0}', space=smem, size = 0x200, scoped, tag = 'input window, operand 2, single buffered']
    #allocation9 [shape = 'u8[1024]{0}', space=vmem, size = 0x400, scoped, tag = 'output window, operand 0, single buffered']
    %8 = vsyncpa [#allocation3], 0
    %9 = vsyncpa [#allocation7], 0
    %10 = vsyncpa [#allocation5], 0
    %11 = vsyncpa [#allocation4], 0
    // Predicated region
    $region2: #{tpu_custom_call.1} parent=1 // pred_check
      _
    $region3: #{tpu_custom_call.1} parent=1 // pred_check_branch
      %13 = sbr.rel (0) target = $region5
    $region4: #{tpu_custom_call.1} parent=1 // pred_region
      %s15 = ssub.s32 128, 128
      %16 = vsyncadd [#allocation3], %s15
      %s18 = sshll.u32 [#allocation2], 4
      %s19 = int_to_ptr.vmem [resolvable:$true] %s18
      %21 = dma.hbm_to_vmem [thread:$0]  %s0, 128, %s19, [#allocation3]
    $region5: #{tpu_custom_call.1} parent=1 // pred_fallthru
      _
    // Predicated region
    $region6: #{tpu_custom_call.1} parent=1 // pred_check
      _
    $region7: #{tpu_custom_call.1} parent=1 // pred_check_branch
      %23 = sbr.rel (0) target = $region9
    $region8: #{tpu_custom_call.1} parent=1 // pred_region
      %s25 = ssub.s32 32, 32
      %26 = vsyncadd [#allocation7], %s25
      %s28 = sshll.u32 [#allocation6], 4
      %s29 = int_to_ptr.vmem [resolvable:$true] %s28
      %31 = dma.hbm_to_vmem [thread:$0]  %s1, 32, %s29, [#allocation7]
    $region9: #{tpu_custom_call.1} parent=1 // pred_fallthru
      _
    // Predicated region
    $region10: #{tpu_custom_call.1} parent=1 // pred_check
      _
    $region11: #{tpu_custom_call.1} parent=1 // pred_check_branch
      %33 = sbr.rel (0) target = $region13
    $region12: #{tpu_custom_call.1} parent=1 // pred_region
      %s35 = ssub.s32 16, 16
      %36 = vsyncadd [#allocation5], %s35
      %s38 = sshll.u32 %s2, 4
      %s39 = int_to_ptr.vmem [resolvable:$true] %s38
      %41 = dma.vmem_to_smem %s39, 16, [#allocation8], [#allocation5]
    $region13: #{tpu_custom_call.1} parent=1 // pred_fallthru
      _
    // Predicated region
    $region14: #{tpu_custom_call.1} parent=1 // pred_check
      _
    $region15: #{tpu_custom_call.1} parent=1 // pred_check_branch
      %43 = sbr.rel (0) target = $region17
    $region16: #{tpu_custom_call.1} parent=1 // pred_region
      %44 = dma.done [#allocation3], 128
    $region17: #{tpu_custom_call.1} parent=1 // pred_fallthru
      _
    // Predicated region
    $region18: #{tpu_custom_call.1} parent=1 // pred_check
      _
    $region19: #{tpu_custom_call.1} parent=1 // pred_check_branch
      %46 = sbr.rel (0) target = $region21
    $region20: #{tpu_custom_call.1} parent=1 // pred_region
      %47 = dma.done [#allocation7], 32
    $region21: #{tpu_custom_call.1} parent=1 // pred_fallthru
      _
    // Predicated region
    $region22: #{tpu_custom_call.1} parent=1 // pred_check
      _
    $region23: #{tpu_custom_call.1} parent=1 // pred_check_branch
      %49 = sbr.rel (0) target = $region25
    $region24: #{tpu_custom_call.1} parent=1 // pred_region
      %50 = dma.done [#allocation5], 16
    $region25: #{tpu_custom_call.1} parent=1 // pred_fallthru
      _
    %51 = sfence
    %v52 = vld [vmem:[#allocation6] sm:$0x3]
    %v53 = vld [vmem:[#allocation2] sm:$0xff]
    %vm54 = vcmask 261120
    %v56 = vsel %vm54, %v52, 0
    %v59 = vsel %vm54, %v53, 0
    %61 = vmatprep.subr.mxu0 0.0
    %62 = vmatpush1.xpose.msra.mxu0 0.0
    %63 = vmatprep.subr.mxu0 0.0
    %64 = vmatpush1.xpose.msra.mxu0 0.0
    %65 = vmatprep.subr.mxu0 0.0
    %66 = vmatpush1.xpose.msra.mxu0 0.0
    %67 = vmatprep.subr.mxu0 0.0
    %68 = vmatpush1.xpose.msra.mxu0 0.0
    %69 = vmatprep.subr.mxu0 0.0
    %70 = vmatpush1.xpose.msra.mxu0 0.0
    %71 = vmatprep.subr.mxu0 0.0
    %72 = vmatpush1.xpose.msra.mxu0 0.0
    %73 = vmatprep.subr.mxu0 0.0
    %74 = vmatpush1.xpose.msra.mxu0 0.0
    %75 = vmatprep.subr.mxu0 0.0
    %76 = vmatpush1.xpose.msra.mxu0 0.0
    %77 = vmatprep.subr.mxu0 0.0
    %78 = vmatpush1.xpose.msra.mxu0 0.0
    %79 = vmatprep.subr.mxu0 0.0
    %80 = vmatpush1.xpose.msra.mxu0 0.0
    %81 = vmatprep.subr.mxu0 0.0
    %82 = vmatpush1.xpose.msra.mxu0 0.0
    %83 = vmatprep.subr.mxu0 0.0
    %84 = vmatpush1.xpose.msra.mxu0 0.0
    %85 = vmatprep.subr.mxu0 0.0
    %86 = vmatpush1.xpose.msra.mxu0 0.0
    %87 = vmatprep.subr.mxu0 0.0
    %88 = vmatpush1.xpose.msra.mxu0 0.0
    %89 = vmatprep.subr.mxu0 0.0
    %90 = vmatpush1.xpose.msra.mxu0 0.0
    %91 = vmatprep.subr.mxu0 0.0
    %92 = vmatpush1.xpose.msra.mxu0 %v59
    %93 = vmatprep.subr.mxu0 0.0
    %94 = vmatpush2.xpose.msra.mxu0 0.0
    %95 = vmatprep.subr.mxu0 0.0
    %96 = vmatpush2.xpose.msra.mxu0 0.0
    %97 = vmatprep.subr.mxu0 0.0
    %98 = vmatpush2.xpose.msra.mxu0 0.0
    %99 = vmatprep.subr.mxu0 0.0
    %100 = vmatpush2.xpose.msra.mxu0 0.0
    %101 = vmatprep.subr.mxu0 0.0
    %102 = vmatpush2.xpose.msra.mxu0 0.0
    %103 = vmatprep.subr.mxu0 0.0
    %104 = vmatpush2.xpose.msra.mxu0 0.0
    %105 = vmatprep.subr.mxu0 0.0
    %106 = vmatpush2.xpose.msra.mxu0 0.0
    %107 = vmatprep.subr.mxu0 0.0
    %108 = vmatpush2.xpose.msra.mxu0 0.0
    %109 = vmatprep.subr.mxu0 0.0
    %110 = vmatpush2.xpose.msra.mxu0 0.0
    %111 = vmatprep.subr.mxu0 0.0
    %112 = vmatpush2.xpose.msra.mxu0 0.0
    %113 = vmatprep.subr.mxu0 0.0
    %114 = vmatpush2.xpose.msra.mxu0 0.0
    %115 = vmatprep.subr.mxu0 0.0
    %116 = vmatpush2.xpose.msra.mxu0 0.0
    %117 = vmatprep.subr.mxu0 0.0
    %118 = vmatpush2.xpose.msra.mxu0 0.0
    %119 = vmatprep.subr.mxu0 0.0
    %120 = vmatpush2.xpose.msra.mxu0 0.0
    %121 = vmatprep.subr.mxu0 0.0
    %122 = vmatpush2.xpose.msra.mxu0 0.0
    %123 = vmatprep.subr.mxu0 0.0
    %124 = vmatpush2.xpose.msra.mxu0 0.0
    %125 = vmatprep.mubr.f32.mxu0 0.0
    %126 = vmatmul.mubr.f32.gmra.mxu0 %v56
    %v127 = vpop.f32.mrf.mxu0
    %v128 = vadd.f32 0.0, %v127
    %v129 = vpop.f32.mrf.mxu0
    %130 = vdwg.mxu0
    %v132 = vrot.slane %v128, 7
    %v134 = vsub.f32 %v128, %v132
    %s135 = sld [smem:[#allocation8 + $0x1]]
    %s136 = sld [smem:[#allocation8]]
    %s137 = ssub.f32 %s135, %s136
    %v138 = vstv %s137
    %v139 = vadd.f32 %v134, %v138
    %v140 = vmax.f32 %v139, 0.0
    %v141 = vand.u32 2147483647, %v139
    %v142 = vsub.f32 0.0, %v141
    %v143 = vmul.f32 %v142, 1.442695
    %v144 = vpow.pop %v143
    %v145 = vadd.f32 %v144, 1.0
    %v146 = vlog2.pop %v145
    %v147 = vmul.f32 %v146, 0.6931472
    %v148 = vadd.f32 %v140, %v147
    %v149 = vsub.f32 0.0, %v148
    %vm150 = vcmask 58369
    %151 = vst.msk [vmem:[#allocation9 - $0x1] sm:$0x2] %vm150, %v149
    %v152 = vsub.f32 %v139, %v148
    %153 = vst.msk [vmem:[#allocation9] sm:$0x2] %vm150, %v152
    // Predicated region
    $region26: #{tpu_custom_call.1} parent=1 // pred_check
      _
    $region27: #{tpu_custom_call.1} parent=1 // pred_check_branch
      %155 = sbr.rel (0) target = $region29
    $region28: #{tpu_custom_call.1} parent=1 // pred_region
      %s157 = ssub.s32 32, 32
      %158 = vsyncadd [#allocation4], %s157
      %s160 = sshll.u32 [#allocation9], 4
      %s161 = int_to_ptr.vmem [resolvable:$true] %s160
      %163 = dma.vmem_to_hbm [thread:$0]  %s161, 32, %s3, [#allocation4]
    $region29: #{tpu_custom_call.1} parent=1 // pred_fallthru
      _
    // Predicated region
    $region30: #{tpu_custom_call.1} parent=1 // pred_check
      _
    $region31: #{tpu_custom_call.1} parent=1 // pred_check_branch
      %165 = sbr.rel (0) target = $region33
    $region32: #{tpu_custom_call.1} parent=1 // pred_region
      %166 = dma.done [#allocation4], 32
    $region33: #{tpu_custom_call.1} parent=1 // pred_fallthru
      _
    %167 = vsyncpa [#allocation3], 1
    %168 = vsyncpa [#allocation7], 1
    %169 = vsyncpa [#allocation4], 1
    %170 = vsyncpa [#allocation5], 1

</llo_original>
